<compile_context>
chip_gen: v5e
topology: v5e:2x2
jax: 0.10.0
libtpu: 0.0.40
codegen_flags: <defaults>
</compile_context>

<pallas_src>
import jax
import jax.numpy as jnp
from jax import lax
from jax.experimental import pallas as pl
from jax.experimental.pallas import tpu as pltpu

IN_FEATURES = 4
HIDDEN = 64
OUT_FEATURES = 2
MAX_TILE_B = 8192                      # default rows-per-grid-step cap
VMEM_LIMIT_BYTES = 48 * 1024 * 1024    # safe on v5e/v6e (128 MiB) and v7x (64 MiB)


def _round_up(n: int, m: int) -> int:
    return ((n + m - 1) // m) * m


def _choose_tile_b(batch: int, max_tile_b: int) -> int:
    # VMEM cost is dominated by lane padding: the (tile_b, 4) input and (tile_b, 2)
    # output blocks each occupy ~512 B/row in VMEM (~2 KiB/row double-buffered),
    # plus the (tile_b, 64) f32 hidden intermediate -> ~20-24 MiB at 8192 rows.
    tb = min(max_tile_b, _round_up(batch, 8))
    # For big batches keep >= 4 tiles so ("parallel",) load-balances v7x's 2 TCs,
    # without dropping below 1024 rows (per-step overhead amortization).
    if batch >= 4 * 1024:
        tb = min(tb, max(1024, _round_up(pl.cdiv(batch, 4), 8)))
    return tb


def _mlp_kernel(x_ref, w1_ref, b1_ref, w2_ref, b2_ref, o_ref):
    # fc1: [tb, 4] @ [4, 64]; all-f32 (HIGHEST precision) -- compute is negligible
    # here, so PyTorch-exact numerics are free.
    h = jnp.dot(x_ref[...], w1_ref[...],
                preferred_element_type=jnp.float32,
                precision=lax.Precision.HIGHEST)
    h = jnp.maximum(h + b1_ref[...], 0.0)
    # fc2: [tb, 64] @ [64, 2]; the narrow output block's last dim equals the full
    # array dim, so the store is legal. The masked vst it implies is VMEM-side only
    # and far cheaper than the 64x HBM writeback inflation of a padded output.
    y = jnp.dot(h, w2_ref[...],
                preferred_element_type=jnp.float32,
                precision=lax.Precision.HIGHEST)
    o_ref[...] = (y + b2_ref[...]).astype(o_ref.dtype)


def sleep_schedule_predictor_pallas(x, w1, b1, w2, b2, *, max_tile_b=MAX_TILE_B):
    """Pallas forward. x: [B, 4] f32, w1: [4, 64], b1: [64], w2: [64, 2], b2: [2]."""
    batch = x.shape[0]
    tile_b = _choose_tile_b(batch, max_tile_b)
    grid = (pl.cdiv(batch, tile_b),)   # partial last block -> masked edge writes

    # Only trivial bias reshapes per call (no padding / casting / scatter).
    b1_2d = b1.reshape(1, HIDDEN)
    b2_2d = b2.reshape(1, OUT_FEATURES)

    flops = 2 * batch * (IN_FEATURES * HIDDEN + HIDDEN * OUT_FEATURES)
    bytes_accessed = (
        batch * IN_FEATURES * 4         # x read
        + batch * OUT_FEATURES * 4      # y write (narrow)
        + (w1.size + w2.size + b1.size + b2.size) * 4
    )

    return pl.pallas_call(
        _mlp_kernel,
        out_shape=jax.ShapeDtypeStruct((batch, OUT_FEATURES), jnp.float32),
        grid=grid,
        in_specs=[
            pl.BlockSpec((tile_b, IN_FEATURES), lambda i: (i, 0)),    # x tile
            pl.BlockSpec((IN_FEATURES, HIDDEN), lambda i: (0, 0)),    # w1 (VMEM-resident)
            pl.BlockSpec((1, HIDDEN), lambda i: (0, 0)),              # b1 (VMEM-resident)
            pl.BlockSpec((HIDDEN, OUT_FEATURES), lambda i: (0, 0)),   # w2 (VMEM-resident)
            pl.BlockSpec((1, OUT_FEATURES), lambda i: (0, 0)),        # b2 (VMEM-resident)
        ],
        out_specs=pl.BlockSpec((tile_b, OUT_FEATURES), lambda i: (i, 0)),
        compiler_params=pltpu.CompilerParams(
            dimension_semantics=("parallel",),
            vmem_limit_bytes=VMEM_LIMIT_BYTES),
        cost_estimate=pl.CostEstimate(
            flops=flops, transcendentals=0, bytes_accessed=bytes_accessed),
    )(x, w1, b1_2d, w2, b2_2d)


def reference_forward(x, w1, b1, w2, b2):
    """Pure-JAX f32 reference (mirrors the PyTorch forward)."""
    h = jnp.maximum(x @ w1 + b1, 0.0)
    return h @ w2 + b2


def sleep_schedule_predictor(x, w1, b1, w2, b2, *, min_pallas_batch=8192):
    """Dispatcher: below the crossover the pallas_call launch overhead dominates
    this tiny mem-bound MLP, so let XLA fuse it; above, use the Pallas kernel."""
    if x.shape[0] < min_pallas_batch:
        return reference_forward(x, w1, b1, w2, b2)
    return sleep_schedule_predictor_pallas(x, w1, b1, w2, b2)


def init_params(key):
    """Deterministic params mimicking nn.Linear init (weights stored as (in, out))."""
    k1, k2, k3, k4 = jax.random.split(key, 4)
    bound1 = 1.0 / jnp.sqrt(float(IN_FEATURES))
    w1 = jax.random.uniform(k1, (IN_FEATURES, HIDDEN), jnp.float32, -bound1, bound1)
    b1 = jax.random.uniform(k2, (HIDDEN,), jnp.float32, -bound1, bound1)
    bound2 = 1.0 / jnp.sqrt(float(HIDDEN))
    w2 = jax.random.uniform(k3, (HIDDEN, OUT_FEATURES), jnp.float32, -bound2, bound2)
    b2 = jax.random.uniform(k4, (OUT_FEATURES,), jnp.float32, -bound2, bound2)
    return w1, b1, w2, b2


if __name__ == "__main__":
    key = jax.random.PRNGKey(0)
    kx1, kx2, kp = jax.random.split(key, 3)
    w1, b1, w2, b2 = init_params(kp)

    # (a) small single-tile batch; (b) ragged multi-tile batch with a forced small
    # tile cap to exercise the cdiv grid + masked partial-last-block writes.
    for kx, batch, max_tile in ((kx1, 8, MAX_TILE_B), (kx2, 300, 128)):
        x = jax.random.normal(kx, (batch, IN_FEATURES), jnp.float32)

        out = sleep_schedule_predictor_pallas(x, w1, b1, w2, b2, max_tile_b=max_tile)
        out = jax.block_until_ready(out)
        assert out.shape == (batch, OUT_FEATURES), out.shape

        ref = reference_forward(x, w1, b1, w2, b2)
        assert jnp.allclose(out, ref, atol=2e-2, rtol=2e-2), "mismatch vs f32 reference"

    print("KERNEL_OK")
</pallas_src>

<mosaic_0001>
module attributes {stable_mosaic.version = 11 : i64} {
  func.func @_mlp_kernel(%arg0: i32, %arg1: memref<8x4xf32, #tpu.memory_space<vmem>>, %arg2: memref<4x64xf32, #tpu.memory_space<vmem>>, %arg3: memref<1x64xf32, #tpu.memory_space<vmem>>, %arg4: memref<64x2xf32, #tpu.memory_space<vmem>>, %arg5: memref<1x2xf32, #tpu.memory_space<vmem>>, %arg6: memref<8x2xf32, #tpu.memory_space<vmem>>) attributes {dimension_semantics = [#tpu.dimension_semantics<parallel>], iteration_bounds = array<i64: 1>, scalar_prefetch = 0 : i64, scratch_operands = 0 : i64, tpu.core_type = #tpu.core_type<tc>, window_params = [{transform_indices = @transform_0, window_bounds = array<i64: 8, 4>}, {pipeline_mode = #tpu.pipeline_mode<synchronous>, transform_indices = @transform_1, window_bounds = array<i64: 4, 64>}, {pipeline_mode = #tpu.pipeline_mode<synchronous>, transform_indices = @transform_2, window_bounds = array<i64: 1, 64>}, {pipeline_mode = #tpu.pipeline_mode<synchronous>, transform_indices = @transform_3, window_bounds = array<i64: 64, 2>}, {pipeline_mode = #tpu.pipeline_mode<synchronous>, transform_indices = @transform_4, window_bounds = array<i64: 1, 2>}, {transform_indices = @transform_5, window_bounds = array<i64: 8, 2>}]} {
    %c0 = arith.constant 0 : index
    %c0_0 = arith.constant 0 : index
    %0 = vector.load %arg1[%c0, %c0_0] : memref<8x4xf32, #tpu.memory_space<vmem>>, vector<8x4xf32>
    %c0_1 = arith.constant 0 : index
    %c0_2 = arith.constant 0 : index
    %1 = vector.load %arg2[%c0_1, %c0_2] : memref<4x64xf32, #tpu.memory_space<vmem>>, vector<4x64xf32>
    %cst = arith.constant dense<0.000000e+00> : vector<8x64xf32>
    %2 = tpu.matmul %0, %1, %cst {dimension_numbers = #tpu.dot_dimension_numbers<[1], [0], [0], [1], [0, 0, 1, 1], [], []>, precision = #tpu.contract_precision<fp32>} : vector<8x4xf32>, vector<4x64xf32>, vector<8x64xf32> -> vector<8x64xf32>
    %c0_3 = arith.constant 0 : index
    %c0_4 = arith.constant 0 : index
    %3 = vector.load %arg3[%c0_3, %c0_4] : memref<1x64xf32, #tpu.memory_space<vmem>>, vector<1x64xf32>
    %4 = vector.broadcast %3 : vector<1x64xf32> to vector<8x64xf32>
    %5 = arith.addf %2, %4 : vector<8x64xf32>
    %cst_5 = arith.constant 0.000000e+00 : f32
    %6 = vector.broadcast %cst_5 : f32 to vector<8x64xf32>
    %7 = arith.maximumf %5, %6 : vector<8x64xf32>
    %c0_6 = arith.constant 0 : index
    %c0_7 = arith.constant 0 : index
    %8 = vector.load %arg4[%c0_6, %c0_7] : memref<64x2xf32, #tpu.memory_space<vmem>>, vector<64x2xf32>
    %cst_8 = arith.constant dense<0.000000e+00> : vector<8x2xf32>
    %9 = tpu.matmul %7, %8, %cst_8 {dimension_numbers = #tpu.dot_dimension_numbers<[1], [0], [0], [1], [0, 0, 1, 1], [], []>, precision = #tpu.contract_precision<fp32>} : vector<8x64xf32>, vector<64x2xf32>, vector<8x2xf32> -> vector<8x2xf32>
    %c0_9 = arith.constant 0 : index
    %c0_10 = arith.constant 0 : index
    %10 = vector.load %arg5[%c0_9, %c0_10] : memref<1x2xf32, #tpu.memory_space<vmem>>, vector<1x2xf32>
    %11 = vector.broadcast %10 : vector<1x2xf32> to vector<8x2xf32>
    %12 = arith.addf %9, %11 : vector<8x2xf32>
    %c0_11 = arith.constant 0 : index
    %c0_12 = arith.constant 0 : index
    %13 = vector.load %arg6[%c0_11, %c0_12] : memref<8x2xf32, #tpu.memory_space<vmem>>, vector<8x2xf32>
    tpu.vector_store %arg6[%c0_11, %c0_12], %12 {strides = array<i32>} : memref<8x2xf32, #tpu.memory_space<vmem>>, vector<8x2xf32>,
    return
  }
  func.func @transform_0(%arg0: i32) -> (i32, i32) {
    %c0_i32 = arith.constant 0 : i32
    %c0_i32_0 = arith.constant 0 : i32
    return %arg0, %c0_i32 : i32, i32
  }
  func.func @transform_1(%arg0: i32) -> (i32, i32) {
    %c0_i32 = arith.constant 0 : i32
    %c0_i32_0 = arith.constant 0 : i32
    %c0_i32_1 = arith.constant 0 : i32
    return %c0_i32, %c0_i32_0 : i32, i32
  }
  func.func @transform_2(%arg0: i32) -> (i32, i32) {
    %c0_i32 = arith.constant 0 : i32
    %c0_i32_0 = arith.constant 0 : i32
    %c0_i32_1 = arith.constant 0 : i32
    return %c0_i32, %c0_i32_0 : i32, i32
  }
  func.func @transform_3(%arg0: i32) -> (i32, i32) {
    %c0_i32 = arith.constant 0 : i32
    %c0_i32_0 = arith.constant 0 : i32
    %c0_i32_1 = arith.constant 0 : i32
    return %c0_i32, %c0_i32_0 : i32, i32
  }
  func.func @transform_4(%arg0: i32) -> (i32, i32) {
    %c0_i32 = arith.constant 0 : i32
    %c0_i32_0 = arith.constant 0 : i32
    %c0_i32_1 = arith.constant 0 : i32
    return %c0_i32, %c0_i32_0 : i32, i32
  }
  func.func @transform_5(%arg0: i32) -> (i32, i32) {
    %c0_i32 = arith.constant 0 : i32
    %c0_i32_0 = arith.constant 0 : i32
    return %arg0, %c0_i32 : i32, i32
  }
}

</mosaic_0001>

<llo_original>
// kernel: tpu_custom_call.1
$region0: #{tpu_custom_call.1}
  #allocation0 [shape = 'u32[]', space=smem, size = 0x4, offset = 0x4, fixed_abs, tag = 'smem constant byte address 0x4 - core index']
  #allocation1 [shape = 'u32[72,128]{1,0:T(1,128)}', space=vmem, size = 0x9000, scoped, tag = 'internal scratch']
  %s0 = inlined_call_operand.vmem [shape: f32[8,4], index: 0, kind: input, shape index: {}]
  %s1 = inlined_call_operand.vmem [shape: f32[4,64], index: 1, kind: input, shape index: {}]
  %s2 = inlined_call_operand.vmem [shape: f32[1,64], index: 2, kind: input, shape index: {}]
  %s3 = inlined_call_operand.vmem [shape: f32[64,2], index: 3, kind: input, shape index: {}]
  %s4 = inlined_call_operand.vmem [shape: f32[1,2], index: 4, kind: input, shape index: {}]
  %s5 = inlined_call_operand.vmem [shape: f32[8,2], index: 5, kind: output, shape index: {}]
  %s6 = sld [smem:[#allocation0]]
  $region30: #{tpu_custom_call.1} parent=0
    _
  %s8 = ssub.s32 1, %s6
  %s9 = scalar_select 0, %s8, %s6
  // Predicated region
  $region2: #{tpu_custom_call.1} parent=0 // pred_check
    _
  $region3: #{tpu_custom_call.1} parent=0 // pred_check_branch
    %11 = sbr.rel (0) target = $region5
  $region4: #{tpu_custom_call.1} parent=0 // pred_region
    _
  $region5: #{tpu_custom_call.1} parent=0 // pred_fallthru
    _
  // Predicated region
  $region6: #{tpu_custom_call.1} parent=0 // pred_check
    _
  $region7: #{tpu_custom_call.1} parent=0 // pred_check_branch
    %13 = sbr.rel (0) target = $region9
  $region8: #{tpu_custom_call.1} parent=0 // pred_region
    _
  $region9: #{tpu_custom_call.1} parent=0 // pred_fallthru
    _
  // Predicated region
  $region10: #{tpu_custom_call.1} parent=0 // pred_check
    _
  $region11: #{tpu_custom_call.1} parent=0 // pred_check_branch
    %15 = sbr.rel (0) target = $region13
  $region12: #{tpu_custom_call.1} parent=0 // pred_region
    _
  $region13: #{tpu_custom_call.1} parent=0 // pred_fallthru
    _
  // Predicated region
  $region14: #{tpu_custom_call.1} parent=0 // pred_check
    _
  $region15: #{tpu_custom_call.1} parent=0 // pred_check_branch
    %17 = sbr.rel (0) target = $region17
  $region16: #{tpu_custom_call.1} parent=0 // pred_region
    _
  $region17: #{tpu_custom_call.1} parent=0 // pred_fallthru
    _
  // Predicated region
  $region18: #{tpu_custom_call.1} parent=0 // pred_check
    _
  $region19: #{tpu_custom_call.1} parent=0 // pred_check_branch
    %19 = sbr.rel (0) target = $region21
  $region20: #{tpu_custom_call.1} parent=0 // pred_region
    _
  $region21: #{tpu_custom_call.1} parent=0 // pred_fallthru
    _
  %v20 = vld [vmem:[%s0] sm:$0xff]
  %v21 = vld [vmem:[%s1] sm:$0xf]
  %v22 = vld [vmem:[%s2] sm:$0x1]
  %v24 = vperm.slane %v22, 0
  %vm26 = vcmask 31744
  %v28 = vsel %vm26, %v20, 0
  %vm30 = vcmask 1043456
  %v32 = vsel %vm30, %v21, 0
  %34 = vmatpush.msra.mxu0 0.0
  %35 = vmatpush.msra.mxu0 0.0
  %36 = vmatpush.msra.mxu0 0.0
  %37 = vmatpush.msra.mxu0 0.0
  %38 = vmatpush.msra.mxu0 0.0
  %39 = vmatpush.msra.mxu0 0.0
  %40 = vmatpush.msra.mxu0 0.0
  %41 = vmatpush.msra.mxu0 0.0
  %42 = vmatpush.msra.mxu0 0.0
  %43 = vmatpush.msra.mxu0 0.0
  %44 = vmatpush.msra.mxu0 0.0
  %45 = vmatpush.msra.mxu0 0.0
  %46 = vmatpush.msra.mxu0 0.0
  %47 = vmatpush.msra.mxu0 0.0
  %48 = vmatpush.msra.mxu0 0.0
  %v49 = vand.u32 %v32, 4294901760
  %50 = vmatpush.msra.mxu0 %v49
  %v51 = vand.u32 %v28, 4294901760
  %v52 = vsub.f32 %v28, %v51
  %v53 = vand.u32 %v52, 4294901760
  %v54 = vsub.f32 %v52, %v53
  %v55 = vand.u32 %v54, 4294901760
  %56 = vmatmul.f32.gmra.mxu0 %v55
  %v57 = vpop.f32.mrf.mxu0
  %v58 = vadd.f32 %v24, %v57
  %59 = vdwg.mxu0
  %60 = vmatpush.msra.mxu0 0.0
  %61 = vmatpush.msra.mxu0 0.0
  %62 = vmatpush.msra.mxu0 0.0
  %63 = vmatpush.msra.mxu0 0.0
  %64 = vmatpush.msra.mxu0 0.0
  %65 = vmatpush.msra.mxu0 0.0
  %66 = vmatpush.msra.mxu0 0.0
  %67 = vmatpush.msra.mxu0 0.0
  %68 = vmatpush.msra.mxu0 0.0
  %69 = vmatpush.msra.mxu0 0.0
  %70 = vmatpush.msra.mxu0 0.0
  %71 = vmatpush.msra.mxu0 0.0
  %72 = vmatpush.msra.mxu0 0.0
  %73 = vmatpush.msra.mxu0 0.0
  %74 = vmatpush.msra.mxu0 0.0
  %v75 = vand.u32 %v32, 4294901760
  %v76 = vsub.f32 %v32, %v75
  %v77 = vand.u32 %v76, 4294901760
  %v78 = vsub.f32 %v76, %v77
  %v79 = vand.u32 %v78, 4294901760
  %80 = vmatpush.msra.mxu0 %v79
  %v81 = vand.u32 %v28, 4294901760
  %82 = vmatmul.f32.gmra.mxu0 %v81
  %v83 = vpop.f32.mrf.mxu0
  %v84 = vadd.f32 %v58, %v83
  %85 = vdwg.mxu0
  %86 = vmatpush.msra.mxu0 0.0
  %87 = vmatpush.msra.mxu0 0.0
  %88 = vmatpush.msra.mxu0 0.0
  %89 = vmatpush.msra.mxu0 0.0
  %90 = vmatpush.msra.mxu0 0.0
  %91 = vmatpush.msra.mxu0 0.0
  %92 = vmatpush.msra.mxu0 0.0
  %93 = vmatpush.msra.mxu0 0.0
  %94 = vmatpush.msra.mxu0 0.0
  %95 = vmatpush.msra.mxu0 0.0
  %96 = vmatpush.msra.mxu0 0.0
  %97 = vmatpush.msra.mxu0 0.0
  %98 = vmatpush.msra.mxu0 0.0
  %99 = vmatpush.msra.mxu0 0.0
  %100 = vmatpush.msra.mxu0 0.0
  %v101 = vand.u32 %v32, 4294901760
  %v102 = vsub.f32 %v32, %v101
  %103 = vmatpush.msra.mxu0 %v102
  %v104 = vand.u32 %v28, 4294901760
  %v105 = vsub.f32 %v28, %v104
  %106 = vmatmul.f32.gmra.mxu0 %v105
  %v107 = vpop.f32.mrf.mxu0
  %v108 = vadd.f32 %v84, %v107
  %109 = vdwg.mxu0
  %110 = vmatpush.msra.mxu0 0.0
  %111 = vmatpush.msra.mxu0 0.0
  %112 = vmatpush.msra.mxu0 0.0
  %113 = vmatpush.msra.mxu0 0.0
  %114 = vmatpush.msra.mxu0 0.0
  %115 = vmatpush.msra.mxu0 0.0
  %116 = vmatpush.msra.mxu0 0.0
  %117 = vmatpush.msra.mxu0 0.0
  %118 = vmatpush.msra.mxu0 0.0
  %119 = vmatpush.msra.mxu0 0.0
  %120 = vmatpush.msra.mxu0 0.0
  %121 = vmatpush.msra.mxu0 0.0
  %122 = vmatpush.msra.mxu0 0.0
  %123 = vmatpush.msra.mxu0 0.0
  %124 = vmatpush.msra.mxu0 0.0
  %v125 = vand.u32 %v32, 4294901760
  %126 = vmatpush.msra.mxu0 %v125
  %v127 = vand.u32 %v28, 4294901760
  %v128 = vsub.f32 %v28, %v127
  %v129 = vand.u32 %v128, 4294901760
  %130 = vmatmul.f32.gmra.mxu0 %v129
  %v131 = vpop.f32.mrf.mxu0
  %v132 = vadd.f32 %v108, %v131
  %133 = vdwg.mxu0
  %134 = vmatpush.msra.mxu0 0.0
  %135 = vmatpush.msra.mxu0 0.0
  %136 = vmatpush.msra.mxu0 0.0
  %137 = vmatpush.msra.mxu0 0.0
  %138 = vmatpush.msra.mxu0 0.0
  %139 = vmatpush.msra.mxu0 0.0
  %140 = vmatpush.msra.mxu0 0.0
  %141 = vmatpush.msra.mxu0 0.0
  %142 = vmatpush.msra.mxu0 0.0
  %143 = vmatpush.msra.mxu0 0.0
  %144 = vmatpush.msra.mxu0 0.0
  %145 = vmatpush.msra.mxu0 0.0
  %146 = vmatpush.msra.mxu0 0.0
  %147 = vmatpush.msra.mxu0 0.0
  %148 = vmatpush.msra.mxu0 0.0
  %v149 = vand.u32 %v32, 4294901760
  %v150 = vsub.f32 %v32, %v149
  %v151 = vand.u32 %v150, 4294901760
  %152 = vmatpush.msra.mxu0 %v151
  %v153 = vand.u32 %v28, 4294901760
  %154 = vmatmul.f32.gmra.mxu0 %v153
  %v155 = vpop.f32.mrf.mxu0
  %v156 = vadd.f32 %v132, %v155
  %157 = vdwg.mxu0
  %158 = vmatpush.msra.mxu0 0.0
  %159 = vmatpush.msra.mxu0 0.0
  %160 = vmatpush.msra.mxu0 0.0
  %161 = vmatpush.msra.mxu0 0.0
  %162 = vmatpush.msra.mxu0 0.0
  %163 = vmatpush.msra.mxu0 0.0
  %164 = vmatpush.msra.mxu0 0.0
  %165 = vmatpush.msra.mxu0 0.0
  %166 = vmatpush.msra.mxu0 0.0
  %167 = vmatpush.msra.mxu0 0.0
  %168 = vmatpush.msra.mxu0 0.0
  %169 = vmatpush.msra.mxu0 0.0
  %170 = vmatpush.msra.mxu0 0.0
  %171 = vmatpush.msra.mxu0 0.0
  %172 = vmatpush.msra.mxu0 0.0
  %v173 = vand.u32 %v32, 4294901760
  %174 = vmatpush.msra.mxu0 %v173
  %v175 = vand.u32 %v28, 4294901760
  %176 = vmatmul.f32.gmra.mxu0 %v175
  %v177 = vpop.f32.mrf.mxu0
  %v178 = vadd.f32 %v156, %v177
  %179 = vdwg.mxu0
  %v180 = vmax.f32 %v178, 0.0
  %v181 = vld [vmem:[%s3] sm:$0xff]
  %v182 = vld [vmem:[%s3 + $0x8] sm:$0xff]
  %v183 = vld [vmem:[%s3 + $0x10] sm:$0xff]
  %v184 = vld [vmem:[%s3 + $0x18] sm:$0xff]
  %v185 = vld [vmem:[%s3 + $0x20] sm:$0xff]
  %v186 = vld [vmem:[%s3 + $0x28] sm:$0xff]
  %v187 = vld [vmem:[%s3 + $0x30] sm:$0xff]
  %v188 = vld [vmem:[%s3 + $0x38] sm:$0xff]
  %v189 = vld [vmem:[%s4] sm:$0x1]
  %v191 = vperm.slane %v189, 0
  %vm193 = vcmask 523264
  %v195 = vsel %vm193, %v180, 0
  %197 = vmatpush.msra.mxu0 0.0
  %198 = vmatpush.msra.mxu0 0.0
  %199 = vmatpush.msra.mxu0 0.0
  %200 = vmatpush.msra.mxu0 0.0
  %201 = vmatpush.msra.mxu0 0.0
  %202 = vmatpush.msra.mxu0 0.0
  %203 = vmatpush.msra.mxu0 0.0
  %204 = vmatpush.msra.mxu0 0.0
  %v205 = vand.u32 %v188, 4294901760
  %206 = vmatpush.msra.mxu0 %v205
  %v207 = vand.u32 %v187, 4294901760
  %208 = vmatpush.msra.mxu0 %v207
  %v209 = vand.u32 %v186, 4294901760
  %210 = vmatpush.msra.mxu0 %v209
  %v211 = vand.u32 %v185, 4294901760
  %212 = vmatpush.msra.mxu0 %v211
  %v213 = vand.u32 %v184, 4294901760
  %214 = vmatpush.msra.mxu0 %v213
  %v215 = vand.u32 %v183, 4294901760
  %216 = vmatpush.msra.mxu0 %v215
  %v217 = vand.u32 %v182, 4294901760
  %218 = vmatpush.msra.mxu0 %v217
  %v219 = vand.u32 %v181, 4294901760
  %220 = vmatpush.msra.mxu0 %v219
  %v221 = vand.u32 %v195, 4294901760
  %v222 = vsub.f32 %v195, %v221
  %v223 = vand.u32 %v222, 4294901760
  %v224 = vsub.f32 %v222, %v223
  %v225 = vand.u32 %v224, 4294901760
  %226 = vmatmul.f32.gmra.mxu0 %v225
  %v227 = vpop.f32.mrf.mxu0
  %v228 = vadd.f32 %v191, %v227
  %229 = vdwg.mxu0
  %230 = vmatpush.msra.mxu0 0.0
  %231 = vmatpush.msra.mxu0 0.0
  %232 = vmatpush.msra.mxu0 0.0
  %233 = vmatpush.msra.mxu0 0.0
  %234 = vmatpush.msra.mxu0 0.0
  %235 = vmatpush.msra.mxu0 0.0
  %236 = vmatpush.msra.mxu0 0.0
  %237 = vmatpush.msra.mxu0 0.0
  %v238 = vand.u32 %v188, 4294901760
  %v239 = vsub.f32 %v188, %v238
  %v240 = vand.u32 %v239, 4294901760
  %v241 = vsub.f32 %v239, %v240
  %v242 = vand.u32 %v241, 4294901760
  %243 = vmatpush.msra.mxu0 %v242
  %v244 = vand.u32 %v187, 4294901760
  %v245 = vsub.f32 %v187, %v244
  %v246 = vand.u32 %v245, 4294901760
  %v247 = vsub.f32 %v245, %v246
  %v248 = vand.u32 %v247, 4294901760
  %249 = vmatpush.msra.mxu0 %v248
  %v250 = vand.u32 %v186, 4294901760
  %v251 = vsub.f32 %v186, %v250
  %v252 = vand.u32 %v251, 4294901760
  %v253 = vsub.f32 %v251, %v252
  %v254 = vand.u32 %v253, 4294901760
  %255 = vmatpush.msra.mxu0 %v254
  %v256 = vand.u32 %v185, 4294901760
  %v257 = vsub.f32 %v185, %v256
  %v258 = vand.u32 %v257, 4294901760
  %v259 = vsub.f32 %v257, %v258
  %v260 = vand.u32 %v259, 4294901760
  %261 = vmatpush.msra.mxu0 %v260
  %v262 = vand.u32 %v184, 4294901760
  %v263 = vsub.f32 %v184, %v262
  %v264 = vand.u32 %v263, 4294901760
  %v265 = vsub.f32 %v263, %v264
  %v266 = vand.u32 %v265, 4294901760
  %267 = vmatpush.msra.mxu0 %v266
  %v268 = vand.u32 %v183, 4294901760
  %v269 = vsub.f32 %v183, %v268
  %v270 = vand.u32 %v269, 4294901760
  %v271 = vsub.f32 %v269, %v270
  %v272 = vand.u32 %v271, 4294901760
  %273 = vmatpush.msra.mxu0 %v272
  %v274 = vand.u32 %v182, 4294901760
  %v275 = vsub.f32 %v182, %v274
  %v276 = vand.u32 %v275, 4294901760
  %v277 = vsub.f32 %v275, %v276
  %v278 = vand.u32 %v277, 4294901760
  %279 = vmatpush.msra.mxu0 %v278
  %v280 = vand.u32 %v181, 4294901760
  %v281 = vsub.f32 %v181, %v280
  %v282 = vand.u32 %v281, 4294901760
  %v283 = vsub.f32 %v281, %v282
  %v284 = vand.u32 %v283, 4294901760
  %285 = vmatpush.msra.mxu0 %v284
  %v286 = vand.u32 %v195, 4294901760
  %287 = vmatmul.f32.gmra.mxu0 %v286
  %v288 = vpop.f32.mrf.mxu0
  %v289 = vadd.f32 %v228, %v288
  %290 = vdwg.mxu0
  %291 = vmatpush.msra.mxu0 0.0
  %292 = vmatpush.msra.mxu0 0.0
  %293 = vmatpush.msra.mxu0 0.0
  %294 = vmatpush.msra.mxu0 0.0
  %295 = vmatpush.msra.mxu0 0.0
  %296 = vmatpush.msra.mxu0 0.0
  %297 = vmatpush.msra.mxu0 0.0
  %298 = vmatpush.msra.mxu0 0.0
  %v299 = vand.u32 %v188, 4294901760
  %v300 = vsub.f32 %v188, %v299
  %301 = vmatpush.msra.mxu0 %v300
  %v302 = vand.u32 %v187, 4294901760
  %v303 = vsub.f32 %v187, %v302
  %304 = vmatpush.msra.mxu0 %v303
  %v305 = vand.u32 %v186, 4294901760
  %v306 = vsub.f32 %v186, %v305
  %307 = vmatpush.msra.mxu0 %v306
  %v308 = vand.u32 %v185, 4294901760
  %v309 = vsub.f32 %v185, %v308
  %310 = vmatpush.msra.mxu0 %v309
  %v311 = vand.u32 %v184, 4294901760
  %v312 = vsub.f32 %v184, %v311
  %313 = vmatpush.msra.mxu0 %v312
  %v314 = vand.u32 %v183, 4294901760
  %v315 = vsub.f32 %v183, %v314
  %316 = vmatpush.msra.mxu0 %v315
  %v317 = vand.u32 %v182, 4294901760
  %v318 = vsub.f32 %v182, %v317
  %319 = vmatpush.msra.mxu0 %v318
  %v320 = vand.u32 %v181, 4294901760
  %v321 = vsub.f32 %v181, %v320
  %322 = vmatpush.msra.mxu0 %v321
  %v323 = vand.u32 %v195, 4294901760
  %v324 = vsub.f32 %v195, %v323
  %325 = vmatmul.f32.gmra.mxu0 %v324
  %v326 = vpop.f32.mrf.mxu0
  %v327 = vadd.f32 %v289, %v326
  %328 = vdwg.mxu0
  %329 = vmatpush.msra.mxu0 0.0
  %330 = vmatpush.msra.mxu0 0.0
  %331 = vmatpush.msra.mxu0 0.0
  %332 = vmatpush.msra.mxu0 0.0
  %333 = vmatpush.msra.mxu0 0.0
  %334 = vmatpush.msra.mxu0 0.0
  %335 = vmatpush.msra.mxu0 0.0
  %336 = vmatpush.msra.mxu0 0.0
  %v337 = vand.u32 %v188, 4294901760
  %338 = vmatpush.msra.mxu0 %v337
  %v339 = vand.u32 %v187, 4294901760
  %340 = vmatpush.msra.mxu0 %v339
  %v341 = vand.u32 %v186, 4294901760
  %342 = vmatpush.msra.mxu0 %v341
  %v343 = vand.u32 %v185, 4294901760
  %344 = vmatpush.msra.mxu0 %v343
  %v345 = vand.u32 %v184, 4294901760
  %346 = vmatpush.msra.mxu0 %v345
  %v347 = vand.u32 %v183, 4294901760
  %348 = vmatpush.msra.mxu0 %v347
  %v349 = vand.u32 %v182, 4294901760
  %350 = vmatpush.msra.mxu0 %v349
  %v351 = vand.u32 %v181, 4294901760
  %352 = vmatpush.msra.mxu0 %v351
  %v353 = vand.u32 %v195, 4294901760
  %v354 = vsub.f32 %v195, %v353
  %v355 = vand.u32 %v354, 4294901760
  %356 = vmatmul.f32.gmra.mxu0 %v355
  %v357 = vpop.f32.mrf.mxu0
  %v358 = vadd.f32 %v327, %v357
  %359 = vdwg.mxu0
  %360 = vmatpush.msra.mxu0 0.0
  %361 = vmatpush.msra.mxu0 0.0
  %362 = vmatpush.msra.mxu0 0.0
  %363 = vmatpush.msra.mxu0 0.0
  %364 = vmatpush.msra.mxu0 0.0
  %365 = vmatpush.msra.mxu0 0.0
  %366 = vmatpush.msra.mxu0 0.0
  %367 = vmatpush.msra.mxu0 0.0
  %v368 = vand.u32 %v188, 4294901760
  %v369 = vsub.f32 %v188, %v368
  %v370 = vand.u32 %v369, 4294901760
  %371 = vmatpush.msra.mxu0 %v370
  %v372 = vand.u32 %v187, 4294901760
  %v373 = vsub.f32 %v187, %v372
  %v374 = vand.u32 %v373, 4294901760
  %375 = vmatpush.msra.mxu0 %v374
  %v376 = vand.u32 %v186, 4294901760
  %v377 = vsub.f32 %v186, %v376
  %v378 = vand.u32 %v377, 4294901760
  %379 = vmatpush.msra.mxu0 %v378
  %v380 = vand.u32 %v185, 4294901760
  %v381 = vsub.f32 %v185, %v380
  %v382 = vand.u32 %v381, 4294901760
  %383 = vmatpush.msra.mxu0 %v382
  %v384 = vand.u32 %v184, 4294901760
  %v385 = vsub.f32 %v184, %v384
  %v386 = vand.u32 %v385, 4294901760
  %387 = vmatpush.msra.mxu0 %v386
  %v388 = vand.u32 %v183, 4294901760
  %v389 = vsub.f32 %v183, %v388
  %v390 = vand.u32 %v389, 4294901760
  %391 = vmatpush.msra.mxu0 %v390
  %v392 = vand.u32 %v182, 4294901760
  %v393 = vsub.f32 %v182, %v392
  %v394 = vand.u32 %v393, 4294901760
  %395 = vmatpush.msra.mxu0 %v394
  %v396 = vand.u32 %v181, 4294901760
  %v397 = vsub.f32 %v181, %v396
  %v398 = vand.u32 %v397, 4294901760
  %399 = vmatpush.msra.mxu0 %v398
  %v400 = vand.u32 %v195, 4294901760
  %401 = vmatmul.f32.gmra.mxu0 %v400
  %v402 = vpop.f32.mrf.mxu0
  %v403 = vadd.f32 %v358, %v402
  %404 = vdwg.mxu0
  %405 = vmatpush.msra.mxu0 0.0
  %406 = vmatpush.msra.mxu0 0.0
  %407 = vmatpush.msra.mxu0 0.0
  %408 = vmatpush.msra.mxu0 0.0
  %409 = vmatpush.msra.mxu0 0.0
  %410 = vmatpush.msra.mxu0 0.0
  %411 = vmatpush.msra.mxu0 0.0
  %412 = vmatpush.msra.mxu0 0.0
  %v413 = vand.u32 %v188, 4294901760
  %414 = vmatpush.msra.mxu0 %v413
  %v415 = vand.u32 %v187, 4294901760
  %416 = vmatpush.msra.mxu0 %v415
  %v417 = vand.u32 %v186, 4294901760
  %418 = vmatpush.msra.mxu0 %v417
  %v419 = vand.u32 %v185, 4294901760
  %420 = vmatpush.msra.mxu0 %v419
  %v421 = vand.u32 %v184, 4294901760
  %422 = vmatpush.msra.mxu0 %v421
  %v423 = vand.u32 %v183, 4294901760
  %424 = vmatpush.msra.mxu0 %v423
  %v425 = vand.u32 %v182, 4294901760
  %426 = vmatpush.msra.mxu0 %v425
  %v427 = vand.u32 %v181, 4294901760
  %428 = vmatpush.msra.mxu0 %v427
  %v429 = vand.u32 %v195, 4294901760
  %430 = vmatmul.f32.gmra.mxu0 %v429
  %v431 = vpop.f32.mrf.mxu0
  %v432 = vadd.f32 %v403, %v431
  %433 = vdwg.mxu0
  %vm434 = vcmask 15360
  %435 = vst.msk [vmem:[%s5] sm:$0xff] %vm434, %v432
  // Predicated region
  $region22: #{tpu_custom_call.1} parent=0 // pred_check
    _
  $region23: #{tpu_custom_call.1} parent=0 // pred_check_branch
    %437 = sbr.rel (0) target = $region25
  $region24: #{tpu_custom_call.1} parent=0 // pred_region
    _
  $region25: #{tpu_custom_call.1} parent=0 // pred_fallthru
    _
  // Predicated region
  $region26: #{tpu_custom_call.1} parent=0 // pred_check
    _
  $region27: #{tpu_custom_call.1} parent=0 // pred_check_branch
    %439 = sbr.rel (0) target = $region29
  $region28: #{tpu_custom_call.1} parent=0 // pred_region
    _
  $region29: #{tpu_custom_call.1} parent=0 // pred_fallthru
    _

</llo_original>
